<compile_context>
chip_gen: v7x
topology: tpu7x:2x2x1
jax: 0.10.0
libtpu: 0.0.40
codegen_flags: <defaults>
</compile_context>

<pallas_src>
import jax
import jax.numpy as jnp
from jax.experimental import pallas as pl
from jax.experimental.pallas import tpu as pltpu


def _value_cross_attn_kernel(ctx_ref, wvt_ref, wot_ref, bo_ref, o_ref):
    # ctx_ref: (1, Cctx, 1)   wvt_ref: (inner, Cctx)   wot_ref: (C, inner)
    # bo_ref : (C, 1)         o_ref  : (1, C, T_HW)
    ctx_col = ctx_ref[0]                                               # [Cctx, 1]
    # v = ctx @ Wv  computed column-oriented:  v_col = Wv^T @ ctx^T    # [inner, 1]
    v_col = jnp.dot(wvt_ref[...], ctx_col, preferred_element_type=jnp.float32)
    # r = v @ Wo + bo  (column-oriented)                               # [C, 1]
    r_col = jnp.dot(wot_ref[...], v_col, preferred_element_type=jnp.float32) + bo_ref[...]
    # Broadcast across the spatial (lane) axis and store, full lane width.
    c, t_hw = o_ref.shape[1], o_ref.shape[2]
    o_ref[0] = jnp.broadcast_to(r_col, (c, t_hw)).astype(o_ref.dtype)


def _choose_hw_tile(hw, max_tile=2048):
    """Spatial tile: multiple of 128 that divides HW (or full HW for odd sizes)."""
    if hw % 128 != 0:
        return hw                       # full-extent block (allowed: equals array dim)
    t = min(hw, max_tile)
    while hw % t != 0:
        t -= 128
    return t


def value_cross_attn(x, context, wq, wk, wv, wo, bo, *, heads, dim_head):
    """x: [B, C, H, W] (NCHW, like PyTorch). context: [B, context_dim].

    wq, wk, heads, dim_head are accepted for interface parity with the PyTorch
    module but are mathematically dead: softmax over one key is identically 1,
    so the output is independent of x, Wq and the attention scale.
    """
    del wq, wk, heads, dim_head
    B, C, H, W = x.shape
    HW = H * W
    Cctx = context.shape[-1]
    inner = wv.shape[-1]

    t_hw = _choose_hw_tile(HW)
    n_t = HW // t_hw

    # Tiny one-time layout plumbing (no activation transposes anywhere).
    ctx_col3 = context.reshape(B, Cctx, 1)   # per-batch context as a column
    wv_t = wv.T                              # [inner, Cctx]
    wo_t = wo.T                              # [C, inner]
    bo_col = bo.reshape(C, 1)

    out = pl.pallas_call(
        _value_cross_attn_kernel,
        out_shape=jax.ShapeDtypeStruct((B, C, HW), x.dtype),
        grid_spec=pltpu.PrefetchScalarGridSpec(
            num_scalar_prefetch=0,
            grid=(B, n_t),
            in_specs=[
                pl.BlockSpec((1, Cctx, 1), lambda b, t: (b, 0, 0)),   # context (column)
                pl.BlockSpec((inner, Cctx), lambda b, t: (0, 0)),     # Wv^T (resident)
                pl.BlockSpec((C, inner), lambda b, t: (0, 0)),        # Wo^T (resident)
                pl.BlockSpec((C, 1), lambda b, t: (0, 0)),            # bias (resident)
            ],
            out_specs=pl.BlockSpec((1, C, t_hw), lambda b, t: (b, 0, t)),
        ),
        compiler_params=pltpu.CompilerParams(
            dimension_semantics=("parallel", "parallel")),
    )(ctx_col3, wv_t, wo_t, bo_col)

    # [B, C, HW] -> [B, C, H, W]  (free reshape, no transpose)
    return out.reshape(B, C, H, W)


def reference_jax(x, context, wq, wk, wv, wo, bo, *, heads, dim_head):
    """Pure-JAX reference mirroring the full PyTorch forward (no simplification)."""
    B, C, H, W = x.shape
    scale = dim_head ** (-0.5)
    x_flat = jnp.transpose(x, (0, 2, 3, 1)).reshape(B, H * W, C)
    q = jnp.einsum('bnc,ci->bni', x_flat, wq)                      # [B, HW, inner]
    k = jnp.einsum('bc,ci->bi', context, wk)[:, None, :]           # [B, 1, inner]
    v = jnp.einsum('bc,ci->bi', context, wv)[:, None, :]           # [B, 1, inner]
    s = jnp.einsum('bni,bsi->bns', q, k) * scale                   # [B, HW, 1]
    attn = jax.nn.softmax(s, axis=-1)
    out = jnp.einsum('bns,bsi->bni', attn, v)                      # [B, HW, inner]
    y = jnp.einsum('bni,ic->bnc', out, wo) + bo.reshape(1, 1, C)
    return jnp.transpose(y.reshape(B, H, W, C), (0, 3, 1, 2))


if __name__ == "__main__":
    # Small, deterministic config
    B, C, H, W = 2, 4, 16, 16          # query_dim = 4
    context_dim = 16
    heads, dim_head = 2, 16            # inner_dim = 32
    inner = heads * dim_head

    key = jax.random.PRNGKey(0)
    kx, kc, k1, k2, k3, k4, k5 = jax.random.split(key, 7)

    x = jax.random.normal(kx, (B, C, H, W), dtype=jnp.float32)
    context = jax.random.normal(kc, (B, context_dim), dtype=jnp.float32)

    # PyTorch Conv2d 1x1 / Linear weights, stored pre-transposed as [in, out]
    # so that the 1x1 conv / linear is a plain channel matmul.
    wq = 0.1 * jax.random.normal(k1, (C, inner), dtype=jnp.float32)
    wk = 0.1 * jax.random.normal(k2, (context_dim, inner), dtype=jnp.float32)
    wv = 0.1 * jax.random.normal(k3, (context_dim, inner), dtype=jnp.float32)
    wo = 0.1 * jax.random.normal(k4, (inner, C), dtype=jnp.float32)
    bo = 0.1 * jax.random.normal(k5, (C,), dtype=jnp.float32)

    y = value_cross_attn(x, context, wq, wk, wv, wo, bo,
                         heads=heads, dim_head=dim_head)
    y = jax.block_until_ready(y)

    y_ref = reference_jax(x, context, wq, wk, wv, wo, bo,
                          heads=heads, dim_head=dim_head)
    assert y.shape == (B, C, H, W)
    assert jnp.allclose(y, y_ref, atol=1e-4, rtol=1e-4)

    print("KERNEL_OK")
</pallas_src>

<mosaic_0001>
module attributes {stable_mosaic.version = 11 : i64} {
  func.func @_value_cross_attn_kernel(%arg0: i32, %arg1: i32, %arg2: memref<1x16x1xf32, #tpu.memory_space<vmem>>, %arg3: memref<32x16xf32, #tpu.memory_space<vmem>>, %arg4: memref<4x32xf32, #tpu.memory_space<vmem>>, %arg5: memref<4x1xf32, #tpu.memory_space<vmem>>, %arg6: memref<1x4x256xf32, #tpu.memory_space<vmem>>) attributes {dimension_semantics = [#tpu.dimension_semantics<parallel>, #tpu.dimension_semantics<parallel>], iteration_bounds = array<i64: 2, 1>, scalar_prefetch = 0 : i64, scratch_operands = 0 : i64, tpu.core_type = #tpu.core_type<tc>, window_params = [{transform_indices = @transform_0, window_bounds = array<i64: 1, 16, 1>}, {pipeline_mode = #tpu.pipeline_mode<synchronous>, transform_indices = @transform_1, window_bounds = array<i64: 32, 16>}, {pipeline_mode = #tpu.pipeline_mode<synchronous>, transform_indices = @transform_2, window_bounds = array<i64: 4, 32>}, {pipeline_mode = #tpu.pipeline_mode<synchronous>, transform_indices = @transform_3, window_bounds = array<i64: 4, 1>}, {transform_indices = @transform_4, window_bounds = array<i64: 1, 4, 256>}]} {
    %c0 = arith.constant 0 : index
    %c0_0 = arith.constant 0 : index
    %c0_1 = arith.constant 0 : index
    %0 = vector.load %arg2[%c0, %c0_0, %c0_1] : memref<1x16x1xf32, #tpu.memory_space<vmem>>, vector<1x16x1xf32>
    %1 = vector.shape_cast %0 : vector<1x16x1xf32> to vector<16x1xf32>
    %c0_2 = arith.constant 0 : index
    %c0_3 = arith.constant 0 : index
    %2 = vector.load %arg3[%c0_2, %c0_3] : memref<32x16xf32, #tpu.memory_space<vmem>>, vector<32x16xf32>
    %cst = arith.constant dense<0.000000e+00> : vector<32x1xf32>
    %3 = tpu.matmul %2, %1, %cst {dimension_numbers = #tpu.dot_dimension_numbers<[1], [0], [0], [1], [0, 0, 1, 1], [], []>} : vector<32x16xf32>, vector<16x1xf32>, vector<32x1xf32> -> vector<32x1xf32>
    %c0_4 = arith.constant 0 : index
    %c0_5 = arith.constant 0 : index
    %4 = vector.load %arg4[%c0_4, %c0_5] : memref<4x32xf32, #tpu.memory_space<vmem>>, vector<4x32xf32>
    %cst_6 = arith.constant dense<0.000000e+00> : vector<4x1xf32>
    %5 = tpu.matmul %4, %3, %cst_6 {dimension_numbers = #tpu.dot_dimension_numbers<[1], [0], [0], [1], [0, 0, 1, 1], [], []>} : vector<4x32xf32>, vector<32x1xf32>, vector<4x1xf32> -> vector<4x1xf32>
    %c0_7 = arith.constant 0 : index
    %c0_8 = arith.constant 0 : index
    %6 = vector.load %arg5[%c0_7, %c0_8] : memref<4x1xf32, #tpu.memory_space<vmem>>, vector<4x1xf32>
    %7 = arith.addf %5, %6 : vector<4x1xf32>
    %8 = vector.shape_cast %7 : vector<4x1xf32> to vector<4x1xf32>
    %9 = vector.broadcast %8 : vector<4x1xf32> to vector<4x256xf32>
    %c0_9 = arith.constant 0 : index
    %c0_10 = arith.constant 0 : index
    %c0_11 = arith.constant 0 : index
    %10 = vector.load %arg6[%c0_9, %c0_10, %c0_11] : memref<1x4x256xf32, #tpu.memory_space<vmem>>, vector<1x4x256xf32>
    %11 = vector.shape_cast %10 : vector<1x4x256xf32> to vector<4x256xf32>
    %12 = vector.shape_cast %9 : vector<4x256xf32> to vector<1x4x256xf32>
    tpu.vector_store %arg6[%c0_9, %c0_10, %c0_11], %12 {strides = array<i32>} : memref<1x4x256xf32, #tpu.memory_space<vmem>>, vector<1x4x256xf32>,
    return
  }
  func.func @transform_0(%arg0: i32, %arg1: i32) -> (i32, i32, i32) {
    %c0_i32 = arith.constant 0 : i32
    %c0_i32_0 = arith.constant 0 : i32
    %c0_i32_1 = arith.constant 0 : i32
    return %arg0, %c0_i32, %c0_i32_0 : i32, i32, i32
  }
  func.func @transform_1(%arg0: i32, %arg1: i32) -> (i32, i32) {
    %c0_i32 = arith.constant 0 : i32
    %c0_i32_0 = arith.constant 0 : i32
    %c0_i32_1 = arith.constant 0 : i32
    return %c0_i32, %c0_i32_0 : i32, i32
  }
  func.func @transform_2(%arg0: i32, %arg1: i32) -> (i32, i32) {
    %c0_i32 = arith.constant 0 : i32
    %c0_i32_0 = arith.constant 0 : i32
    %c0_i32_1 = arith.constant 0 : i32
    return %c0_i32, %c0_i32_0 : i32, i32
  }
  func.func @transform_3(%arg0: i32, %arg1: i32) -> (i32, i32) {
    %c0_i32 = arith.constant 0 : i32
    %c0_i32_0 = arith.constant 0 : i32
    %c0_i32_1 = arith.constant 0 : i32
    return %c0_i32, %c0_i32_0 : i32, i32
  }
  func.func @transform_4(%arg0: i32, %arg1: i32) -> (i32, i32, i32) {
    %c0_i32 = arith.constant 0 : i32
    %c0_i32_0 = arith.constant 0 : i32
    return %arg0, %c0_i32, %arg1 : i32, i32, i32
  }
}

</mosaic_0001>

<llo_original>
// kernel: tpu_custom_call.1
$region0: #{tpu_custom_call.1}
  #allocation0 [shape = 'u32[]', space=smem, size = 0x4, offset = 0x4, fixed_abs, tag = 'smem constant byte address 0x4 - core index']
  #allocation1 [shape = 'u32[144,128]{1,0:T(1,128)}', space=vmem, size = 0x12000, scoped, tag = 'internal scratch']
  %s0 = inlined_call_operand.vmem [shape: f32[2,16,1], index: 0, kind: input, shape index: {}]
  %s1 = inlined_call_operand.vmem [shape: f32[32,16], index: 1, kind: input, shape index: {}]
  %s2 = inlined_call_operand.vmem [shape: f32[4,32], index: 2, kind: input, shape index: {}]
  %s3 = inlined_call_operand.vmem [shape: f32[4,1], index: 3, kind: input, shape index: {}]
  %s4 = inlined_call_operand.hbm [shape: f32[2,4,256], index: 4, kind: output, shape index: {}]
  %s5 = sld [smem:[#allocation0]]
  $region49: #{tpu_custom_call.1} parent=0
    _
  %s7 = ssub.s32 1, %s5
  %s8 = scalar_select 0, %s7, %s5
  $region1: #{tpu_custom_call.1} parent=0
    #allocation2 [shape = 'u8[8192]{0}', space=vmem, size = 0x2000, scoped, tag = 'output window, operand 0']
    #allocation3 [shape = 's32[2]{0}', space=sflag, size = 0x8, scoped, tag = 'scoped memory for tpu_custom_call.1']
    %9 = vsyncpa [#allocation3], 0
    %s10 = scalar_lea.sflag [#allocation3], 1
    %11 = vsyncpa %s10, 0
    loop: start=0, step=1, limit=4
    $region2: #{tpu_custom_call.1} parent=1 // loop_pre_header
      _
    $region3: #{tpu_custom_call.1} parent=1 // loop_header
      %s13 = sphi 0, %s17
      %p14 = scmp.ge.s32.totalorder %s13, 4
      %s20 = sphi 0, %s32
      %s21 = sphi 0, %s28
      %s22 = sphi 0, %s20
      %s23 = sphi 0, %s21
      %s24 = sphi 0, %s22
      %s25 = sphi 0, %s23
      %s35 = sphi 0, %s37
      %s38 = sphi 0, %s35
      %s39 = sphi 0, %s38
      %s55 = sphi 0, %s39
      %s59 = sphi 0, %s59
      %s61 = sphi 0, %s59
      %s62 = sphi 0, %s61
      %s76 = sphi 0, %s62
      %s80 = sphi 0, %s80
      %s82 = sphi 0, %s80
      %s83 = sphi 0, %s82
      %s97 = sphi 0, %s83
      %s101 = sphi 0, %s101
      %s103 = sphi 0, %s101
      %s104 = sphi 0, %s103
      %s118 = sphi 0, %s104
      %s126 = sphi 0, %s128
      %s129 = sphi 0, %s126
      %s130 = sphi 0, %s129
      %s146 = sphi 0, %s130
    $region4: #{tpu_custom_call.1} parent=1 // loop_header_branch
      %16 = sbr.rel (%p14) target = $region8
    $region5: #{tpu_custom_call.1} parent=1 // loop_body
      %s18 = ssub.s32 %s13, 1
      %s19 = ssub.s32 %s13, 2
      %s26 = sadd.s32 1, %s21
      %p27 = scmp.ge.s32.totalorder %s26, 1
      %s28 = scalar_select %p27, 0, %s26
      %s29 = sadd.s32 1, %s20
      %s30 = scalar_select %p27, %s29, %s20
      %p31 = scmp.ge.s32.totalorder %s30, 2
      %s32 = scalar_select %p31, 0, %s30
      %s33 = ssub.s32 %s20, %s32
      %p34 = scmp.eq.s32.totalorder %s33, 0
      %s36 = sadd.s32 %s35, 1
      %s37 = scalar_select %p34, %s35, %s36
      %p40 = pneg %p34
      %p41 = scmp.eq.s32.totalorder %s13, 1
      %p42 = por %p40, %p41
      %p43 = scmp.ne.s32.totalorder %s35, %s38
      %p44 = scmp.eq.s32.totalorder %s13, 0
      %p45 = por %p43, %p44
      %p46 = scmp.ne.s32.totalorder %s35, %s38
      %p47 = scmp.eq.s32.totalorder %s18, 1
      %p48 = por %p46, %p47
      %p49 = scmp.ne.s32.totalorder %s38, %s39
      %p50 = scmp.eq.s32.totalorder %s18, 0
      %p51 = por %p49, %p50
      %p52 = scmp.ne.s32.totalorder %s38, %s39
      %p53 = scmp.eq.s32.totalorder %s19, 1
      %p54 = por %p52, %p53
      %p56 = scmp.ne.s32.totalorder %s39, %s55
      %p57 = scmp.eq.s32.totalorder %s19, 0
      %p58 = por %p56, %p57
      %s60 = sadd.s32 %s59, 1
      %p63 = scmp.eq.s32.totalorder %s13, 1
      %p64 = scmp.ne.s32.totalorder %s59, %s61
      %p65 = scmp.eq.s32.totalorder %s13, 0
      %p66 = por %p64, %p65
      %p67 = scmp.ne.s32.totalorder %s59, %s61
      %p68 = scmp.eq.s32.totalorder %s18, 1
      %p69 = por %p67, %p68
      %p70 = scmp.ne.s32.totalorder %s61, %s62
      %p71 = scmp.eq.s32.totalorder %s18, 0
      %p72 = por %p70, %p71
      %p73 = scmp.ne.s32.totalorder %s61, %s62
      %p74 = scmp.eq.s32.totalorder %s19, 1
      %p75 = por %p73, %p74
      %p77 = scmp.ne.s32.totalorder %s62, %s76
      %p78 = scmp.eq.s32.totalorder %s19, 0
      %p79 = por %p77, %p78
      %s81 = sadd.s32 %s80, 1
      %p84 = scmp.eq.s32.totalorder %s13, 1
      %p85 = scmp.ne.s32.totalorder %s80, %s82
      %p86 = scmp.eq.s32.totalorder %s13, 0
      %p87 = por %p85, %p86
      %p88 = scmp.ne.s32.totalorder %s80, %s82
      %p89 = scmp.eq.s32.totalorder %s18, 1
      %p90 = por %p88, %p89
      %p91 = scmp.ne.s32.totalorder %s82, %s83
      %p92 = scmp.eq.s32.totalorder %s18, 0
      %p93 = por %p91, %p92
      %p94 = scmp.ne.s32.totalorder %s82, %s83
      %p95 = scmp.eq.s32.totalorder %s19, 1
      %p96 = por %p94, %p95
      %p98 = scmp.ne.s32.totalorder %s83, %s97
      %p99 = scmp.eq.s32.totalorder %s19, 0
      %p100 = por %p98, %p99
      %s102 = sadd.s32 %s101, 1
      %p105 = scmp.eq.s32.totalorder %s13, 1
      %p106 = scmp.ne.s32.totalorder %s101, %s103
      %p107 = scmp.eq.s32.totalorder %s13, 0
      %p108 = por %p106, %p107
      %p109 = scmp.ne.s32.totalorder %s101, %s103
      %p110 = scmp.eq.s32.totalorder %s18, 1
      %p111 = por %p109, %p110
      %p112 = scmp.ne.s32.totalorder %s103, %s104
      %p113 = scmp.eq.s32.totalorder %s18, 0
      %p114 = por %p112, %p113
      %p115 = scmp.ne.s32.totalorder %s103, %s104
      %p116 = scmp.eq.s32.totalorder %s19, 1
      %p117 = por %p115, %p116
      %p119 = scmp.ne.s32.totalorder %s104, %s118
      %p120 = scmp.eq.s32.totalorder %s19, 0
      %p121 = por %p119, %p120
      %s122 = ssub.s32 %s20, %s32
      %s123 = ssub.s32 %s21, %s28
      %s124 = sor.u32 %s122, %s123
      %p125 = scmp.eq.s32.totalorder %s124, 0
      %s127 = sadd.s32 %s126, 1
      %s128 = scalar_select %p125, %s126, %s127
      %p131 = pneg %p125
      %p132 = scmp.eq.s32.totalorder %s13, 1
      %p133 = por %p131, %p132
      %p134 = scmp.ne.s32.totalorder %s126, %s129
      %p135 = scmp.eq.s32.totalorder %s13, 0
      %p136 = por %p134, %p135
      %p137 = scmp.ne.s32.totalorder %s126, %s129
      %p138 = scmp.eq.s32.totalorder %s18, 1
      %p139 = por %p137, %p138
      %p140 = scmp.ne.s32.totalorder %s129, %s130
      %p141 = scmp.eq.s32.totalorder %s18, 0
      %p142 = por %p140, %p141
      %p143 = scmp.ne.s32.totalorder %s129, %s130
      %p144 = scmp.eq.s32.totalorder %s19, 1
      %p145 = por %p143, %p144
      %p147 = scmp.ne.s32.totalorder %s130, %s146
      %p148 = scmp.eq.s32.totalorder %s19, 0
      %p149 = por %p147, %p148
      %p150 = scmp.le.s32.totalorder 1, %s13
      %p151 = scmp.lt.s32.totalorder %s13, 3
      %p152 = pnand %p150, %p151
      %p153 = pneg %p152
      // Predicated region
      $region9: #{tpu_custom_call.1} parent=5 // pred_check
        _
      $region10: #{tpu_custom_call.1} parent=5 // pred_check_branch
        %155 = sbr.rel (%p152) target = $region12
      $region11: #{tpu_custom_call.1} parent=5 // pred_region
        %s156 = ssub.s32 %s13, 1
        // Predicated region
        $region13: #{tpu_custom_call.1} parent=11 // pred_check
          %p157 = pneg %p72
        $region14: #{tpu_custom_call.1} parent=11 // pred_check_branch
          %159 = sbr.rel (%p157) target = $region16
        $region15: #{tpu_custom_call.1} parent=11 // pred_region
          _
        $region16: #{tpu_custom_call.1} parent=11 // pred_fallthru
          _
        // Predicated region
        $region17: #{tpu_custom_call.1} parent=11 // pred_check
          %p160 = pneg %p93
        $region18: #{tpu_custom_call.1} parent=11 // pred_check_branch
          %162 = sbr.rel (%p160) target = $region20
        $region19: #{tpu_custom_call.1} parent=11 // pred_region
          _
        $region20: #{tpu_custom_call.1} parent=11 // pred_fallthru
          _
        // Predicated region
        $region21: #{tpu_custom_call.1} parent=11 // pred_check
          %p163 = pneg %p114
        $region22: #{tpu_custom_call.1} parent=11 // pred_check_branch
          %165 = sbr.rel (%p163) target = $region24
        $region23: #{tpu_custom_call.1} parent=11 // pred_region
          _
        $region24: #{tpu_custom_call.1} parent=11 // pred_fallthru
          _
      $region12: #{tpu_custom_call.1} parent=5 // pred_fallthru
        _
      %p166 = scmp.lt.s32.totalorder %s13, 2
      // Predicated region
      $region25: #{tpu_custom_call.1} parent=5 // pred_check
        %p167 = pneg %p166
      $region26: #{tpu_custom_call.1} parent=5 // pred_check_branch
        %169 = sbr.rel (%p167) target = $region28
      $region27: #{tpu_custom_call.1} parent=5 // pred_region
        // Predicated region
        $region29: #{tpu_custom_call.1} parent=27 // pred_check
          %p170 = pneg %p45
        $region30: #{tpu_custom_call.1} parent=27 // pred_check_branch
          %172 = sbr.rel (%p170) target = $region32
        $region31: #{tpu_custom_call.1} parent=27 // pred_region
          %p173 = scmp.lt.s32.totalorder %s20, 1
          %s174 = scalar_select %p173, %s20, 1
          %s175 = smul.addr %s174, 2
          %s176 = smul.addr %s175, 8
          %s177 = scalar_lea.vmem %s0, %s176
        $region32: #{tpu_custom_call.1} parent=27 // pred_fallthru
          _
      $region28: #{tpu_custom_call.1} parent=5 // pred_fallthru
        _
      %p178 = scmp.le.s32.totalorder 1, %s13
      %p179 = scmp.lt.s32.totalorder %s13, 3
      %p180 = pnand %p178, %p179
      %p181 = pneg %p180
      // Predicated region
      $region33: #{tpu_custom_call.1} parent=5 // pred_check
        _
      $region34: #{tpu_custom_call.1} parent=5 // pred_check_branch
        %183 = sbr.rel (%p180) target = $region36
      $region35: #{tpu_custom_call.1} parent=5 // pred_region
        %s184 = ssub.s32 %s13, 1
        %p185 = scmp.lt.s32.totalorder %s22, 1
        %s186 = scalar_select %p185, %s22, 1
        %s187 = smul.addr %s186, 2
        %s188 = smul.addr %s187, 8
        %s189 = scalar_lea.vmem %s0, %s188
        %p190 = pneg %p51
        %p191 = pneg %p48
        %p192 = pneg %p72
        %p193 = pneg %p69
        %p194 = pneg %p93
        %p195 = pneg %p90
        %p196 = pneg %p114
        %p197 = pneg %p111
        %p198 = pneg %p142
        %p199 = pneg %p139
        %s200 = sand.u32 %s129, 1
        %s201 = scalar_lea.sflag [#allocation3], %s200
        %s202 = sand.u32 %s129, 1
        %s203 = smul.addr %s202, 8
        %s204 = scalar_lea.vmem [#allocation2], %s203
        %p205 = scmp.lt.s32.totalorder %s22, 1
        %s206 = scalar_select %p205, %s22, 1
        %s207 = smul.addr %s206, 2
        %s208 = smul.addr %s207, 8
        %s209 = scalar_lea.vmem %s0, %s208
        %s210 = smul.u32 2, %s23
        %v211 = vld [vmem:[%s209] sm:$0xff]
        %v212 = vld [vmem:[%s209 + $0x8] sm:$0xff]
        %v213 = vld [vmem:[%s1] sm:$0xff]
        %v214 = vld [vmem:[%s1 + $0x8] sm:$0xff]
        %v215 = vld [vmem:[%s1 + $0x10] sm:$0xff]
        %v216 = vld [vmem:[%s1 + $0x18] sm:$0xff]
        %vm217 = vcmask 130048
        %v219 = vsel %vm217, %v213, 0
        %v222 = vsel %vm217, %v214, 0
        %v225 = vsel %vm217, %v215, 0
        %v228 = vsel %vm217, %v216, 0
        %230 = vmatprep.subr.mxu0 0.0
        %231 = vmatpush1.msra.mxu0 %v211
        %232 = vmatprep.subr.mxu0 0.0
        %233 = vmatpush1.msra.mxu0 %v212
        %234 = vmatprep.subr.mxu0 0.0
        %235 = vmatpush1.msra.mxu0 0.0
        %236 = vmatprep.subr.mxu0 0.0
        %237 = vmatpush1.msra.mxu0 0.0
        %238 = vmatprep.subr.mxu0 0.0
        %239 = vmatpush1.msra.mxu0 0.0
        %240 = vmatprep.subr.mxu0 0.0
        %241 = vmatpush1.msra.mxu0 0.0
        %242 = vmatprep.subr.mxu0 0.0
        %243 = vmatpush1.msra.mxu0 0.0
        %244 = vmatprep.subr.mxu0 0.0
        %245 = vmatpush1.msra.mxu0 0.0
        %246 = vmatprep.subr.mxu0 0.0
        %247 = vmatpush1.msra.mxu0 0.0
        %248 = vmatprep.subr.mxu0 0.0
        %249 = vmatpush1.msra.mxu0 0.0
        %250 = vmatprep.subr.mxu0 0.0
        %251 = vmatpush1.msra.mxu0 0.0
        %252 = vmatprep.subr.mxu0 0.0
        %253 = vmatpush1.msra.mxu0 0.0
        %254 = vmatprep.subr.mxu0 0.0
        %255 = vmatpush1.msra.mxu0 0.0
        %256 = vmatprep.subr.mxu0 0.0
        %257 = vmatpush1.msra.mxu0 0.0
        %258 = vmatprep.subr.mxu0 0.0
        %259 = vmatpush1.msra.mxu0 0.0
        %260 = vmatprep.subr.mxu0 0.0
        %261 = vmatpush1.msra.mxu0 0.0
        %262 = vmatprep.subr.mxu0 0.0
        %263 = vmatpush1.msra.mxu0 0.0
        %264 = vmatprep.subr.mxu0 0.0
        %265 = vmatpush1.msra.mxu0 0.0
        %266 = vmatprep.subr.mxu0 0.0
        %267 = vmatpush1.msra.mxu0 0.0
        %268 = vmatprep.subr.mxu0 0.0
        %269 = vmatpush1.msra.mxu0 0.0
        %270 = vmatprep.subr.mxu0 0.0
        %271 = vmatpush1.msra.mxu0 0.0
        %272 = vmatprep.subr.mxu0 0.0
        %273 = vmatpush1.msra.mxu0 0.0
        %274 = vmatprep.subr.mxu0 0.0
        %275 = vmatpush1.msra.mxu0 0.0
        %276 = vmatprep.subr.mxu0 0.0
        %277 = vmatpush1.msra.mxu0 0.0
        %278 = vmatprep.subr.mxu0 0.0
        %279 = vmatpush1.msra.mxu0 0.0
        %280 = vmatprep.subr.mxu0 0.0
        %281 = vmatpush1.msra.mxu0 0.0
        %282 = vmatprep.subr.mxu0 0.0
        %283 = vmatpush1.msra.mxu0 0.0
        %284 = vmatprep.subr.mxu0 0.0
        %285 = vmatpush1.msra.mxu0 0.0
        %286 = vmatprep.subr.mxu0 0.0
        %287 = vmatpush1.msra.mxu0 0.0
        %288 = vmatprep.subr.mxu0 0.0
        %289 = vmatpush1.msra.mxu0 0.0
        %290 = vmatprep.subr.mxu0 0.0
        %291 = vmatpush1.msra.mxu0 0.0
        %292 = vmatprep.subr.mxu0 0.0
        %293 = vmatpush1.msra.mxu0 0.0
        %294 = vmatprep.mubr.f32.mxu0 0.0
        %295 = vmatmul.mubr.f32.gmra.mrb[0].mxu0 %v219
        %v296 = vpop.f32.mrb[0].mxu0
        %v297 = vadd.f32 0.0, %v296
        %v298 = vpop.f32.mrb[0].mxu0
        %299 = vmatprep.mubr.f32.mxu0 0.0
        %300 = vmatmul.mubr.f32.gmra.mrb[0].mxu0 %v222
        %v301 = vpop.f32.mrb[0].mxu0
        %v302 = vadd.f32 0.0, %v301
        %v303 = vpop.f32.mrb[0].mxu0
        %304 = vmatprep.mubr.f32.mxu0 0.0
        %305 = vmatmul.mubr.f32.gmra.mrb[0].mxu0 %v225
        %v306 = vpop.f32.mrb[0].mxu0
        %v307 = vadd.f32 0.0, %v306
        %v308 = vpop.f32.mrb[0].mxu0
        %309 = vmatprep.mubr.f32.mxu0 0.0
        %310 = vmatmul.mubr.f32.gmra.mrb[0].mxu0 %v228
        %v311 = vpop.f32.mrb[0].mxu0
        %v312 = vadd.f32 0.0, %v311
        %v313 = vpop.f32.mrb[0].mxu0
        %314 = vdwg.mxu0
        %v315 = vld [vmem:[%s2] sm:$0xf]
        %v316 = vld [vmem:[%s3] sm:$0xf]
        %vm317 = vcmask 261120
        %v319 = vsel %vm317, %v315, 0
        %321 = vmatprep.subr.mxu0 0.0
        %322 = vmatpush1.msra.mxu0 %v297
        %323 = vmatprep.subr.mxu0 0.0
        %324 = vmatpush1.msra.mxu0 %v302
        %325 = vmatprep.subr.mxu0 0.0
        %326 = vmatpush1.msra.mxu0 %v307
        %327 = vmatprep.subr.mxu0 0.0
        %328 = vmatpush1.msra.mxu0 %v312
        %329 = vmatprep.subr.mxu0 0.0
        %330 = vmatpush1.msra.mxu0 0.0
        %331 = vmatprep.subr.mxu0 0.0
        %332 = vmatpush1.msra.mxu0 0.0
        %333 = vmatprep.subr.mxu0 0.0
        %334 = vmatpush1.msra.mxu0 0.0
        %335 = vmatprep.subr.mxu0 0.0
        %336 = vmatpush1.msra.mxu0 0.0
        %337 = vmatprep.subr.mxu0 0.0
        %338 = vmatpush1.msra.mxu0 0.0
        %339 = vmatprep.subr.mxu0 0.0
        %340 = vmatpush1.msra.mxu0 0.0
        %341 = vmatprep.subr.mxu0 0.0
        %342 = vmatpush1.msra.mxu0 0.0
        %343 = vmatprep.subr.mxu0 0.0
        %344 = vmatpush1.msra.mxu0 0.0
        %345 = vmatprep.subr.mxu0 0.0
        %346 = vmatpush1.msra.mxu0 0.0
        %347 = vmatprep.subr.mxu0 0.0
        %348 = vmatpush1.msra.mxu0 0.0
        %349 = vmatprep.subr.mxu0 0.0
        %350 = vmatpush1.msra.mxu0 0.0
        %351 = vmatprep.subr.mxu0 0.0
        %352 = vmatpush1.msra.mxu0 0.0
        %353 = vmatprep.subr.mxu0 0.0
        %354 = vmatpush1.msra.mxu0 0.0
        %355 = vmatprep.subr.mxu0 0.0
        %356 = vmatpush1.msra.mxu0 0.0
        %357 = vmatprep.subr.mxu0 0.0
        %358 = vmatpush1.msra.mxu0 0.0
        %359 = vmatprep.subr.mxu0 0.0
        %360 = vmatpush1.msra.mxu0 0.0
        %361 = vmatprep.subr.mxu0 0.0
        %362 = vmatpush1.msra.mxu0 0.0
        %363 = vmatprep.subr.mxu0 0.0
        %364 = vmatpush1.msra.mxu0 0.0
        %365 = vmatprep.subr.mxu0 0.0
        %366 = vmatpush1.msra.mxu0 0.0
        %367 = vmatprep.subr.mxu0 0.0
        %368 = vmatpush1.msra.mxu0 0.0
        %369 = vmatprep.subr.mxu0 0.0
        %370 = vmatpush1.msra.mxu0 0.0
        %371 = vmatprep.subr.mxu0 0.0
        %372 = vmatpush1.msra.mxu0 0.0
        %373 = vmatprep.subr.mxu0 0.0
        %374 = vmatpush1.msra.mxu0 0.0
        %375 = vmatprep.subr.mxu0 0.0
        %376 = vmatpush1.msra.mxu0 0.0
        %377 = vmatprep.subr.mxu0 0.0
        %378 = vmatpush1.msra.mxu0 0.0
        %379 = vmatprep.subr.mxu0 0.0
        %380 = vmatpush1.msra.mxu0 0.0
        %381 = vmatprep.subr.mxu0 0.0
        %382 = vmatpush1.msra.mxu0 0.0
        %383 = vmatprep.subr.mxu0 0.0
        %384 = vmatpush1.msra.mxu0 0.0
        %385 = vmatprep.mubr.f32.mxu0 0.0
        %386 = vmatmul.mubr.f32.gmra.mrb[0].mxu0 %v319
        %v387 = vpop.f32.mrb[0].mxu0
        %v388 = vadd.f32 %v316, %v387
        %v389 = vpop.f32.mrb[0].mxu0
        %390 = vdwg.mxu0
        %392 = vset.pattern.permute.xlu0 0
        %393 = vperm.xlu0 %392, %v388
        %v394 = vpop.permute.xlu0 %393
        %v396 = vunpack.c.l.s4 839922192
        %v397 = vunpack.c.0.s8 %v396
        %v398 = vlaneseq
        %v399 = vshrl.u32 %v398, 7
        %v400 = vsub.s32 %v397, %v399
        %v401 = vrot.slane %v394, %v400
        %403 = vst [vmem:[%s204] sm:$0xff] %v401
        %s404 = sand.u32 %s129, 1
        %s405 = scalar_lea.sflag [#allocation3], %s404
        %s406 = sand.u32 %s129, 1
        %s407 = smul.addr %s406, 8
        %s408 = scalar_lea.vmem [#allocation2], %s407
        // Predicated region
        $region37: #{tpu_custom_call.1} parent=35 // pred_check
          %p409 = pneg %p139
        $region38: #{tpu_custom_call.1} parent=35 // pred_check_branch
          %411 = sbr.rel (%p409) target = $region40
        $region39: #{tpu_custom_call.1} parent=35 // pred_region
          %s412 = smul.u32 2, %s23
          %s414 = ssub.s32 128, 128
          %415 = vsyncadd %s405, %s414
          %s416 = smul.addr %s22, 2
          %s417 = sadd.s32 %s412, %s416
          %s418 = smul.addr %s417, 64
          %s419 = scalar_lea.hbm %s4, %s418
          %s421 = sshll.u32 %s408, 4
          %s422 = int_to_ptr.vmem [resolvable:$true] %s421
          %424 = dma.vmem_to_hbm [thread:$0]  %s422, 128, %s419, %s405
        $region40: #{tpu_custom_call.1} parent=35 // pred_fallthru
          _
      $region36: #{tpu_custom_call.1} parent=5 // pred_fallthru
        _
      %p425 = scmp.le.s32.totalorder 2, %s13
      // Predicated region
      $region41: #{tpu_custom_call.1} parent=5 // pred_check
        %p426 = pneg %p425
      $region42: #{tpu_custom_call.1} parent=5 // pred_check_branch
        %428 = sbr.rel (%p426) target = $region44
      $region43: #{tpu_custom_call.1} parent=5 // pred_region
        %s429 = ssub.s32 %s13, 2
        // Predicated region
        $region45: #{tpu_custom_call.1} parent=43 // pred_check
          %p430 = pneg %p145
        $region46: #{tpu_custom_call.1} parent=43 // pred_check_branch
          %432 = sbr.rel (%p430) target = $region48
        $region47: #{tpu_custom_call.1} parent=43 // pred_region
          %s433 = sand.u32 %s130, 1
          %s434 = scalar_lea.sflag [#allocation3], %s433
          %s435 = sand.u32 %s130, 1
          %s436 = smul.addr %s435, 8
          %s437 = scalar_lea.vmem [#allocation2], %s436
          %438 = dma.done %s434, 128
        $region48: #{tpu_custom_call.1} parent=43 // pred_fallthru
          _
      $region44: #{tpu_custom_call.1} parent=5 // pred_fallthru
        _
    $region6: #{tpu_custom_call.1} parent=1 // loop_footer
      %s17 = sadd.s32 1, %s13
    $region7: #{tpu_custom_call.1} parent=1 // loop_footer_branch
      %12 = sbr.rel target = $region3
    $region8: #{tpu_custom_call.1} parent=1 // loop_exit
      _
    %439 = vsyncpa [#allocation3], 1
    %s440 = scalar_lea.sflag [#allocation3], 1
    %441 = vsyncpa %s440, 1

</llo_original>
